<compile_context>
chip_gen: v6e
topology: v6e:2x2x1
jax: 0.10.0
libtpu: 0.0.40
codegen_flags: <defaults>
</compile_context>

<pallas_src>
import jax
import jax.numpy as jnp
from jax.experimental import pallas as pl
from jax.experimental.pallas import tpu as pltpu

HIDDEN = 100          # hidden_units default in the PyTorch module
H_PAD = 128           # lane-aligned padded hidden width
OUT_PAD = 8           # sublane-aligned padded output width (>= 3)
DEFAULT_TILE_B = 2048  # batch tile (amortizes grid-step overhead)


def mlp_kernel(x_ref, w1_ref, wmid_ref, w5_ref, b_ref, o_ref):
    # x_ref:    (TILE_B, 2)        f32
    # w1_ref:   (2, H_PAD)         f32   (layer1 weight, zero-padded)
    # wmid_ref: (3, H_PAD, H_PAD)  f32   (layers 2-4, zero-padded)
    # w5_ref:   (H_PAD, H_PAD)     f32   (layer5, zero-padded, lane-dense MXU)
    # b_ref:    (5, H_PAD)         f32   (all biases, zero-padded)
    # o_ref:    (TILE_B, OUT_PAD)  f32   (cols 3..7 are exact zeros)
    x = x_ref[...]
    w1 = w1_ref[...]
    b = b_ref[...]

    # Layer 1: K=2 is far too small for the MXU -> two VPU broadcast FMAs.
    h = x[:, 0:1] * w1[0:1, :] + x[:, 1:2] * w1[1:2, :] + b[0:1, :]

    # Layers 2-4: 128x128 MXU matmuls, weights VMEM-resident.
    for l in range(3):
        h = jnp.dot(h, wmid_ref[l], preferred_element_type=jnp.float32) + b[l + 1:l + 2, :]

    # Layer 5: keep the matmul lane-dense (128 wide) on the MXU...
    h = jnp.dot(h, w5_ref[...], preferred_element_type=jnp.float32) + b[4:5, :]

    # ...but only write the first OUT_PAD lanes back to HBM (16x less writeback).
    o_ref[...] = h[:, :OUT_PAD].astype(o_ref.dtype)


def _round_up(x, m):
    return ((x + m - 1) // m) * m


def _cdiv(a, b):
    return (a + b - 1) // b


def _pad_to(a, shape):
    return jnp.pad(a, [(0, s - d) for d, s in zip(a.shape, shape)])


def pack_params(params):
    """One-time packing/padding of the 5 Linear layers for the kernel.
    Zero padding is exact: padded weight rows/cols and biases are zero, so
    padded lanes stay zero through every layer."""
    (w1, b1), (w2, b2), (w3, b3), (w4, b4), (w5, b5) = params
    w1p = _pad_to(w1, (2, H_PAD))
    wmid = jnp.stack([_pad_to(w, (H_PAD, H_PAD)) for w in (w2, w3, w4)])
    w5p = _pad_to(w5, (H_PAD, H_PAD))
    bias = jnp.stack([_pad_to(b.reshape(-1), (H_PAD,)) for b in (b1, b2, b3, b4, b5)])
    return w1p, wmid, w5p, bias


def mlp_forward(x, packed, out_dim=3, tile_b=DEFAULT_TILE_B):
    """x: [B, 2] f32 -> [B, out_dim] f32. Identical math to the PyTorch forward."""
    w1p, wmid, w5p, bias = packed
    B = x.shape[0]

    # Adaptive batch tiling:
    #  - >= 2 grid steps for moderately large B so both v7x TensorCores get work,
    #  - tile chosen as ceil(B/num_tiles) rounded to 8 so padding waste is tiny.
    num_tiles = _cdiv(B, tile_b)
    if num_tiles == 1 and B >= 256:
        num_tiles = 2
    tb = _round_up(_cdiv(B, num_tiles), 8)
    b_pad = tb * num_tiles
    x_pad = jnp.pad(x, ((0, b_pad - B), (0, 0)))
    grid = (num_tiles,)

    # Cost estimate reflects padded work actually performed.
    flops = 2 * b_pad * (2 * H_PAD + 4 * H_PAD * H_PAD)
    bytes_accessed = 4 * (2 * H_PAD + 4 * H_PAD * H_PAD + 5 * H_PAD
                          + b_pad * (2 + OUT_PAD))

    out = pl.pallas_call(
        mlp_kernel,
        out_shape=jax.ShapeDtypeStruct((b_pad, OUT_PAD), jnp.float32),
        grid=grid,
        in_specs=[
            pl.BlockSpec((tb, 2), lambda i: (i, 0)),               # x: tiled over batch
            pl.BlockSpec((2, H_PAD), lambda i: (0, 0)),            # w1: VMEM-resident
            pl.BlockSpec((3, H_PAD, H_PAD), lambda i: (0, 0, 0)),  # w2..w4: resident
            pl.BlockSpec((H_PAD, H_PAD), lambda i: (0, 0)),        # w5: resident
            pl.BlockSpec((5, H_PAD), lambda i: (0, 0)),            # biases: resident
        ],
        out_specs=pl.BlockSpec((tb, OUT_PAD), lambda i: (i, 0)),
        compiler_params=pltpu.CompilerParams(
            dimension_semantics=("parallel",)),
        cost_estimate=pl.CostEstimate(
            flops=flops, transcendentals=0, bytes_accessed=bytes_accessed),
    )(x_pad, w1p, wmid, w5p, bias)

    return out[:B, :out_dim]


def init_params(key, hidden_units=HIDDEN):
    """Deterministic init mimicking PyTorch's default Linear init
    (uniform(-1/sqrt(fan_in), 1/sqrt(fan_in))). Weights stored transposed vs.
    PyTorch: shape (in_features, out_features), so forward is x @ W + b."""
    dims = [(2, hidden_units),
            (hidden_units, hidden_units),
            (hidden_units, hidden_units),
            (hidden_units, hidden_units),
            (hidden_units, 3)]
    params = []
    for (fan_in, fan_out) in dims:
        key, kw, kb = jax.random.split(key, 3)
        bound = 1.0 / jnp.sqrt(float(fan_in))
        w = jax.random.uniform(kw, (fan_in, fan_out), jnp.float32, -bound, bound)
        b = jax.random.uniform(kb, (fan_out,), jnp.float32, -bound, bound)
        params.append((w, b))
    return params


def mlp_reference(x, params):
    h = x
    for (w, b) in params:
        h = h @ w + b
    return h


if __name__ == "__main__":
    key = jax.random.PRNGKey(0)
    key, kx = jax.random.split(key)
    B = 8
    x = jax.random.normal(kx, (B, 2), jnp.float32)
    params = init_params(key)
    packed = pack_params(params)   # one-time padding/packing, outside hot path

    out = mlp_forward(x, packed)
    out = jax.block_until_ready(out)

    ref = mlp_reference(x, params)
    assert out.shape == (B, 3), out.shape
    assert jnp.allclose(out, ref, atol=1e-4, rtol=1e-4), (
        f"max abs diff = {jnp.max(jnp.abs(out - ref))}")
    print("KERNEL_OK")
</pallas_src>

<mosaic_0001>
module attributes {stable_mosaic.version = 11 : i64} {
  func.func @mlp_kernel(%arg0: i32, %arg1: memref<8x2xf32, #tpu.memory_space<vmem>>, %arg2: memref<2x128xf32, #tpu.memory_space<vmem>>, %arg3: memref<3x128x128xf32, #tpu.memory_space<vmem>>, %arg4: memref<128x128xf32, #tpu.memory_space<vmem>>, %arg5: memref<5x128xf32, #tpu.memory_space<vmem>>, %arg6: memref<8x8xf32, #tpu.memory_space<vmem>>) attributes {dimension_semantics = [#tpu.dimension_semantics<parallel>], iteration_bounds = array<i64: 1>, scalar_prefetch = 0 : i64, scratch_operands = 0 : i64, tpu.core_type = #tpu.core_type<tc>, window_params = [{transform_indices = @transform_0, window_bounds = array<i64: 8, 2>}, {pipeline_mode = #tpu.pipeline_mode<synchronous>, transform_indices = @transform_1, window_bounds = array<i64: 2, 128>}, {pipeline_mode = #tpu.pipeline_mode<synchronous>, transform_indices = @transform_2, window_bounds = array<i64: 3, 128, 128>}, {pipeline_mode = #tpu.pipeline_mode<synchronous>, transform_indices = @transform_3, window_bounds = array<i64: 128, 128>}, {pipeline_mode = #tpu.pipeline_mode<synchronous>, transform_indices = @transform_4, window_bounds = array<i64: 5, 128>}, {transform_indices = @transform_5, window_bounds = array<i64: 8, 8>}]} {
    %c0 = arith.constant 0 : index
    %c0_0 = arith.constant 0 : index
    %0 = vector.load %arg1[%c0, %c0_0] : memref<8x2xf32, #tpu.memory_space<vmem>>, vector<8x2xf32>
    %c0_1 = arith.constant 0 : index
    %c0_2 = arith.constant 0 : index
    %1 = vector.load %arg2[%c0_1, %c0_2] : memref<2x128xf32, #tpu.memory_space<vmem>>, vector<2x128xf32>
    %c0_3 = arith.constant 0 : index
    %c0_4 = arith.constant 0 : index
    %2 = vector.load %arg5[%c0_3, %c0_4] : memref<5x128xf32, #tpu.memory_space<vmem>>, vector<5x128xf32>
    %3 = vector.extract_strided_slice %0 {offsets = [0, 0], sizes = [8, 1], strides = [1, 1]} : vector<8x2xf32> to vector<8x1xf32>
    %4 = vector.extract_strided_slice %1 {offsets = [0, 0], sizes = [1, 128], strides = [1, 1]} : vector<2x128xf32> to vector<1x128xf32>
    %5 = vector.broadcast %3 : vector<8x1xf32> to vector<8x128xf32>
    %6 = vector.broadcast %4 : vector<1x128xf32> to vector<8x128xf32>
    %7 = arith.mulf %5, %6 : vector<8x128xf32>
    %8 = vector.extract_strided_slice %0 {offsets = [0, 1], sizes = [8, 1], strides = [1, 1]} : vector<8x2xf32> to vector<8x1xf32>
    %9 = vector.extract_strided_slice %1 {offsets = [1, 0], sizes = [1, 128], strides = [1, 1]} : vector<2x128xf32> to vector<1x128xf32>
    %10 = vector.broadcast %8 : vector<8x1xf32> to vector<8x128xf32>
    %11 = vector.broadcast %9 : vector<1x128xf32> to vector<8x128xf32>
    %12 = arith.mulf %10, %11 : vector<8x128xf32>
    %13 = arith.addf %7, %12 : vector<8x128xf32>
    %14 = vector.extract_strided_slice %2 {offsets = [0, 0], sizes = [1, 128], strides = [1, 1]} : vector<5x128xf32> to vector<1x128xf32>
    %15 = vector.broadcast %14 : vector<1x128xf32> to vector<8x128xf32>
    %16 = arith.addf %13, %15 : vector<8x128xf32>
    %c0_5 = arith.constant 0 : index
    %c0_6 = arith.constant 0 : index
    %c0_7 = arith.constant 0 : index
    %17 = vector.load %arg3[%c0_5, %c0_6, %c0_7] : memref<3x128x128xf32, #tpu.memory_space<vmem>>, vector<1x128x128xf32>
    %18 = vector.shape_cast %17 : vector<1x128x128xf32> to vector<128x128xf32>
    %cst = arith.constant dense<0.000000e+00> : vector<8x128xf32>
    %19 = tpu.matmul %16, %18, %cst {dimension_numbers = #tpu.dot_dimension_numbers<[1], [0], [0], [1], [0, 0, 1, 1], [], []>} : vector<8x128xf32>, vector<128x128xf32>, vector<8x128xf32> -> vector<8x128xf32>
    %20 = vector.extract_strided_slice %2 {offsets = [1, 0], sizes = [1, 128], strides = [1, 1]} : vector<5x128xf32> to vector<1x128xf32>
    %21 = vector.broadcast %20 : vector<1x128xf32> to vector<8x128xf32>
    %22 = arith.addf %19, %21 : vector<8x128xf32>
    %c1 = arith.constant 1 : index
    %c0_8 = arith.constant 0 : index
    %c0_9 = arith.constant 0 : index
    %23 = vector.load %arg3[%c1, %c0_8, %c0_9] : memref<3x128x128xf32, #tpu.memory_space<vmem>>, vector<1x128x128xf32>
    %24 = vector.shape_cast %23 : vector<1x128x128xf32> to vector<128x128xf32>
    %cst_10 = arith.constant dense<0.000000e+00> : vector<8x128xf32>
    %25 = tpu.matmul %22, %24, %cst_10 {dimension_numbers = #tpu.dot_dimension_numbers<[1], [0], [0], [1], [0, 0, 1, 1], [], []>} : vector<8x128xf32>, vector<128x128xf32>, vector<8x128xf32> -> vector<8x128xf32>
    %26 = vector.extract_strided_slice %2 {offsets = [2, 0], sizes = [1, 128], strides = [1, 1]} : vector<5x128xf32> to vector<1x128xf32>
    %27 = vector.broadcast %26 : vector<1x128xf32> to vector<8x128xf32>
    %28 = arith.addf %25, %27 : vector<8x128xf32>
    %c2 = arith.constant 2 : index
    %c0_11 = arith.constant 0 : index
    %c0_12 = arith.constant 0 : index
    %29 = vector.load %arg3[%c2, %c0_11, %c0_12] : memref<3x128x128xf32, #tpu.memory_space<vmem>>, vector<1x128x128xf32>
    %30 = vector.shape_cast %29 : vector<1x128x128xf32> to vector<128x128xf32>
    %cst_13 = arith.constant dense<0.000000e+00> : vector<8x128xf32>
    %31 = tpu.matmul %28, %30, %cst_13 {dimension_numbers = #tpu.dot_dimension_numbers<[1], [0], [0], [1], [0, 0, 1, 1], [], []>} : vector<8x128xf32>, vector<128x128xf32>, vector<8x128xf32> -> vector<8x128xf32>
    %32 = vector.extract_strided_slice %2 {offsets = [3, 0], sizes = [1, 128], strides = [1, 1]} : vector<5x128xf32> to vector<1x128xf32>
    %33 = vector.broadcast %32 : vector<1x128xf32> to vector<8x128xf32>
    %34 = arith.addf %31, %33 : vector<8x128xf32>
    %c0_14 = arith.constant 0 : index
    %c0_15 = arith.constant 0 : index
    %35 = vector.load %arg4[%c0_14, %c0_15] : memref<128x128xf32, #tpu.memory_space<vmem>>, vector<128x128xf32>
    %cst_16 = arith.constant dense<0.000000e+00> : vector<8x128xf32>
    %36 = tpu.matmul %34, %35, %cst_16 {dimension_numbers = #tpu.dot_dimension_numbers<[1], [0], [0], [1], [0, 0, 1, 1], [], []>} : vector<8x128xf32>, vector<128x128xf32>, vector<8x128xf32> -> vector<8x128xf32>
    %37 = vector.extract_strided_slice %2 {offsets = [4, 0], sizes = [1, 128], strides = [1, 1]} : vector<5x128xf32> to vector<1x128xf32>
    %38 = vector.broadcast %37 : vector<1x128xf32> to vector<8x128xf32>
    %39 = arith.addf %36, %38 : vector<8x128xf32>
    %40 = vector.extract_strided_slice %39 {offsets = [0, 0], sizes = [8, 8], strides = [1, 1]} : vector<8x128xf32> to vector<8x8xf32>
    %c0_17 = arith.constant 0 : index
    %c0_18 = arith.constant 0 : index
    %41 = vector.load %arg6[%c0_17, %c0_18] : memref<8x8xf32, #tpu.memory_space<vmem>>, vector<8x8xf32>
    tpu.vector_store %arg6[%c0_17, %c0_18], %40 {strides = array<i32>} : memref<8x8xf32, #tpu.memory_space<vmem>>, vector<8x8xf32>,
    return
  }
  func.func @transform_0(%arg0: i32) -> (i32, i32) {
    %c0_i32 = arith.constant 0 : i32
    %c0_i32_0 = arith.constant 0 : i32
    return %arg0, %c0_i32 : i32, i32
  }
  func.func @transform_1(%arg0: i32) -> (i32, i32) {
    %c0_i32 = arith.constant 0 : i32
    %c0_i32_0 = arith.constant 0 : i32
    %c0_i32_1 = arith.constant 0 : i32
    return %c0_i32, %c0_i32_0 : i32, i32
  }
  func.func @transform_2(%arg0: i32) -> (i32, i32, i32) {
    %c0_i32 = arith.constant 0 : i32
    %c0_i32_0 = arith.constant 0 : i32
    %c0_i32_1 = arith.constant 0 : i32
    %c0_i32_2 = arith.constant 0 : i32
    return %c0_i32, %c0_i32_0, %c0_i32_1 : i32, i32, i32
  }
  func.func @transform_3(%arg0: i32) -> (i32, i32) {
    %c0_i32 = arith.constant 0 : i32
    %c0_i32_0 = arith.constant 0 : i32
    %c0_i32_1 = arith.constant 0 : i32
    return %c0_i32, %c0_i32_0 : i32, i32
  }
  func.func @transform_4(%arg0: i32) -> (i32, i32) {
    %c0_i32 = arith.constant 0 : i32
    %c0_i32_0 = arith.constant 0 : i32
    %c0_i32_1 = arith.constant 0 : i32
    return %c0_i32, %c0_i32_0 : i32, i32
  }
  func.func @transform_5(%arg0: i32) -> (i32, i32) {
    %c0_i32 = arith.constant 0 : i32
    %c0_i32_0 = arith.constant 0 : i32
    return %arg0, %c0_i32 : i32, i32
  }
}

</mosaic_0001>

<llo_original>
// kernel: tpu_custom_call.1
$region0: #{tpu_custom_call.1}
  #allocation0 [shape = 'u32[]', space=smem, size = 0x4, offset = 0x4, fixed_abs, tag = 'smem constant byte address 0x4 - core index']
  #allocation1 [shape = 'u32[144,128]{1,0:T(1,128)}', space=vmem, size = 0x12000, scoped, tag = 'internal scratch']
  %s0 = inlined_call_operand.vmem [shape: f32[8,2], index: 0, kind: input, shape index: {}]
  %s1 = inlined_call_operand.vmem [shape: f32[2,128], index: 1, kind: input, shape index: {}]
  %s2 = inlined_call_operand.hbm [shape: f32[3,128,128], index: 2, kind: input, shape index: {}]
  %s3 = inlined_call_operand.hbm [shape: f32[128,128], index: 3, kind: input, shape index: {}]
  %s4 = inlined_call_operand.vmem [shape: f32[5,128], index: 4, kind: input, shape index: {}]
  %s5 = inlined_call_operand.hbm [shape: f32[8,8], index: 5, kind: output, shape index: {}]
  %s6 = sld [smem:[#allocation0]]
  $region38: #{tpu_custom_call.1} parent=0
    _
  %s8 = ssub.s32 1, %s6
  %s9 = scalar_select 0, %s8, %s6
  $region1: #{tpu_custom_call.1} parent=0
    #allocation2 [shape = 'u8[196608]{0}', space=vmem, size = 0x30000, scoped, tag = 'input window, operand 2, single buffered']
    #allocation3 [shape = 's32[1]{0}', space=sflag, size = 0x4, scoped, tag = 'scoped memory for tpu_custom_call.1']
    #allocation4 [shape = 's32[1]{0}', space=sflag, size = 0x4, scoped, tag = 'scoped memory for tpu_custom_call.1']
    #allocation5 [shape = 'u8[65536]{0}', space=vmem, size = 0x10000, scoped, tag = 'input window, operand 3, single buffered']
    #allocation6 [shape = 's32[1]{0}', space=sflag, size = 0x4, scoped, tag = 'scoped memory for tpu_custom_call.1']
    #allocation7 [shape = 'u8[4096]{0}', space=vmem, size = 0x1000, scoped, tag = 'output window, operand 0, single buffered']
    %10 = vsyncpa [#allocation3], 0
    %11 = vsyncpa [#allocation6], 0
    %12 = vsyncpa [#allocation4], 0
    // Predicated region
    $region2: #{tpu_custom_call.1} parent=1 // pred_check
      _
    $region3: #{tpu_custom_call.1} parent=1 // pred_check_branch
      %14 = sbr.rel (0) target = $region5
    $region4: #{tpu_custom_call.1} parent=1 // pred_region
      _
    $region5: #{tpu_custom_call.1} parent=1 // pred_fallthru
      _
    // Predicated region
    $region6: #{tpu_custom_call.1} parent=1 // pred_check
      _
    $region7: #{tpu_custom_call.1} parent=1 // pred_check_branch
      %16 = sbr.rel (0) target = $region9
    $region8: #{tpu_custom_call.1} parent=1 // pred_region
      _
    $region9: #{tpu_custom_call.1} parent=1 // pred_fallthru
      _
    // Predicated region
    $region10: #{tpu_custom_call.1} parent=1 // pred_check
      _
    $region11: #{tpu_custom_call.1} parent=1 // pred_check_branch
      %18 = sbr.rel (0) target = $region13
    $region12: #{tpu_custom_call.1} parent=1 // pred_region
      %s20 = ssub.s32 6144, 6144
      %21 = vsyncadd [#allocation3], %s20
      %s22 = sshll.u32 [#allocation2], 4
      %s23 = int_to_ptr.vmem [resolvable:$true] %s22
      %28 = dma.hbm_to_vmem [thread:$0]  %s2, 6144, %s23, [#allocation3], 128, 128, 8
    $region13: #{tpu_custom_call.1} parent=1 // pred_fallthru
      _
    // Predicated region
    $region14: #{tpu_custom_call.1} parent=1 // pred_check
      _
    $region15: #{tpu_custom_call.1} parent=1 // pred_check_branch
      %30 = sbr.rel (0) target = $region17
    $region16: #{tpu_custom_call.1} parent=1 // pred_region
      %s32 = ssub.s32 2048, 2048
      %33 = vsyncadd [#allocation6], %s32
      %s34 = sshll.u32 [#allocation5], 4
      %s35 = int_to_ptr.vmem [resolvable:$true] %s34
      %40 = dma.hbm_to_vmem [thread:$0]  %s3, 2048, %s35, [#allocation6], 128, 128, 8
    $region17: #{tpu_custom_call.1} parent=1 // pred_fallthru
      _
    // Predicated region
    $region18: #{tpu_custom_call.1} parent=1 // pred_check
      _
    $region19: #{tpu_custom_call.1} parent=1 // pred_check_branch
      %42 = sbr.rel (0) target = $region21
    $region20: #{tpu_custom_call.1} parent=1 // pred_region
      _
    $region21: #{tpu_custom_call.1} parent=1 // pred_fallthru
      _
    // Predicated region
    $region22: #{tpu_custom_call.1} parent=1 // pred_check
      _
    $region23: #{tpu_custom_call.1} parent=1 // pred_check_branch
      %44 = sbr.rel (0) target = $region25
    $region24: #{tpu_custom_call.1} parent=1 // pred_region
      %45 = dma.done [#allocation3], 6144
    $region25: #{tpu_custom_call.1} parent=1 // pred_fallthru
      _
    // Predicated region
    $region26: #{tpu_custom_call.1} parent=1 // pred_check
      _
    $region27: #{tpu_custom_call.1} parent=1 // pred_check_branch
      %47 = sbr.rel (0) target = $region29
    $region28: #{tpu_custom_call.1} parent=1 // pred_region
      %48 = dma.done [#allocation6], 2048
    $region29: #{tpu_custom_call.1} parent=1 // pred_fallthru
      _
    %v49 = vld [vmem:[%s0] sm:$0xff]
    %v50 = vld [vmem:[%s1] sm:$0x3]
    %v51 = vld [vmem:[%s4] sm:$0x1f]
    %53 = vset.pattern.permute.xlu0 0
    %54 = vperm.xlu0 %53, %v49
    %v55 = vpop.permute.xlu0 %54
    %v57 = vlaneseq
    %v58 = vshrl.u32 %v57, 7
    %v59 = vsub.s32 0, %v58
    %v60 = vrot.slane %v50, %v59
    %v61 = vmul.f32 %v55, %v60
    %62 = vset.pattern.permute.xlu0 1
    %63 = vperm.xlu0 %62, %v49
    %v64 = vpop.permute.xlu0 %63
    %v66 = vlaneseq
    %v67 = vshrl.u32 %v66, 7
    %v68 = vsub.s32 1, %v67
    %v69 = vrot.slane %v50, %v68
    %v70 = vmul.f32 %v64, %v69
    %v71 = vadd.f32 %v61, %v70
    %v72 = vlaneseq
    %v73 = vshrl.u32 %v72, 7
    %v74 = vsub.s32 0, %v73
    %v75 = vrot.slane %v51, %v74
    %v76 = vadd.f32 %v71, %v75
    %v77 = vld [vmem:[#allocation2] sm:$0xff]
    %v78 = vld [vmem:[#allocation2 + $0x8] sm:$0xff]
    %v79 = vld [vmem:[#allocation2 + $0x10] sm:$0xff]
    %v80 = vld [vmem:[#allocation2 + $0x18] sm:$0xff]
    %v81 = vld [vmem:[#allocation2 + $0x20] sm:$0xff]
    %v82 = vld [vmem:[#allocation2 + $0x28] sm:$0xff]
    %v83 = vld [vmem:[#allocation2 + $0x30] sm:$0xff]
    %v84 = vld [vmem:[#allocation2 + $0x38] sm:$0xff]
    %v85 = vld [vmem:[#allocation2 + $0x40] sm:$0xff]
    %v86 = vld [vmem:[#allocation2 + $0x48] sm:$0xff]
    %v87 = vld [vmem:[#allocation2 + $0x50] sm:$0xff]
    %v88 = vld [vmem:[#allocation2 + $0x58] sm:$0xff]
    %v89 = vld [vmem:[#allocation2 + $0x60] sm:$0xff]
    %v90 = vld [vmem:[#allocation2 + $0x68] sm:$0xff]
    %v91 = vld [vmem:[#allocation2 + $0x70] sm:$0xff]
    %v92 = vld [vmem:[#allocation2 + $0x78] sm:$0xff]
    %v93 = vlaneseq
    %v94 = vshrl.u32 %v93, 7
    %v95 = vsub.s32 1, %v94
    %v96 = vrot.slane %v51, %v95
    %97 = vmatprep.subr.mxu0 0.0
    %98 = vmatpush1.msra.mxu0 %v92
    %99 = vmatprep.subr.mxu0 0.0
    %100 = vmatpush1.msra.mxu0 %v91
    %101 = vmatprep.subr.mxu0 0.0
    %102 = vmatpush1.msra.mxu0 %v90
    %103 = vmatprep.subr.mxu0 0.0
    %104 = vmatpush1.msra.mxu0 %v89
    %105 = vmatprep.subr.mxu0 0.0
    %106 = vmatpush1.msra.mxu0 %v88
    %107 = vmatprep.subr.mxu0 0.0
    %108 = vmatpush1.msra.mxu0 %v87
    %109 = vmatprep.subr.mxu0 0.0
    %110 = vmatpush1.msra.mxu0 %v86
    %111 = vmatprep.subr.mxu0 0.0
    %112 = vmatpush1.msra.mxu0 %v85
    %113 = vmatprep.subr.mxu0 0.0
    %114 = vmatpush1.msra.mxu0 %v84
    %115 = vmatprep.subr.mxu0 0.0
    %116 = vmatpush1.msra.mxu0 %v83
    %117 = vmatprep.subr.mxu0 0.0
    %118 = vmatpush1.msra.mxu0 %v82
    %119 = vmatprep.subr.mxu0 0.0
    %120 = vmatpush1.msra.mxu0 %v81
    %121 = vmatprep.subr.mxu0 0.0
    %122 = vmatpush1.msra.mxu0 %v80
    %123 = vmatprep.subr.mxu0 0.0
    %124 = vmatpush1.msra.mxu0 %v79
    %125 = vmatprep.subr.mxu0 0.0
    %126 = vmatpush1.msra.mxu0 %v78
    %127 = vmatprep.subr.mxu0 0.0
    %128 = vmatpush1.msra.mxu0 %v77
    %129 = vmatprep.subr.mxu0 0.0
    %130 = vmatpush2.msra.mxu0 0.0
    %131 = vmatprep.subr.mxu0 0.0
    %132 = vmatpush2.msra.mxu0 0.0
    %133 = vmatprep.subr.mxu0 0.0
    %134 = vmatpush2.msra.mxu0 0.0
    %135 = vmatprep.subr.mxu0 0.0
    %136 = vmatpush2.msra.mxu0 0.0
    %137 = vmatprep.subr.mxu0 0.0
    %138 = vmatpush2.msra.mxu0 0.0
    %139 = vmatprep.subr.mxu0 0.0
    %140 = vmatpush2.msra.mxu0 0.0
    %141 = vmatprep.subr.mxu0 0.0
    %142 = vmatpush2.msra.mxu0 0.0
    %143 = vmatprep.subr.mxu0 0.0
    %144 = vmatpush2.msra.mxu0 0.0
    %145 = vmatprep.subr.mxu0 0.0
    %146 = vmatpush2.msra.mxu0 0.0
    %147 = vmatprep.subr.mxu0 0.0
    %148 = vmatpush2.msra.mxu0 0.0
    %149 = vmatprep.subr.mxu0 0.0
    %150 = vmatpush2.msra.mxu0 0.0
    %151 = vmatprep.subr.mxu0 0.0
    %152 = vmatpush2.msra.mxu0 0.0
    %153 = vmatprep.subr.mxu0 0.0
    %154 = vmatpush2.msra.mxu0 0.0
    %155 = vmatprep.subr.mxu0 0.0
    %156 = vmatpush2.msra.mxu0 0.0
    %157 = vmatprep.subr.mxu0 0.0
    %158 = vmatpush2.msra.mxu0 0.0
    %159 = vmatprep.subr.mxu0 0.0
    %160 = vmatpush2.msra.mxu0 0.0
    %161 = vmatprep.mubr.f32.mxu0 0.0
    %162 = vmatmul.mubr.f32.gmra.mxu0 %v76
    %v163 = vpop.f32.mrf.mxu0
    %v164 = vadd.f32 %v96, %v163
    %v165 = vpop.f32.mrf.mxu0
    %166 = vdwg.mxu0
    %s167 = scalar_lea.vmem [#allocation2], 128
    %v168 = vld [vmem:[%s167] sm:$0xff]
    %v169 = vld [vmem:[%s167 + $0x8] sm:$0xff]
    %v170 = vld [vmem:[%s167 + $0x10] sm:$0xff]
    %v171 = vld [vmem:[%s167 + $0x18] sm:$0xff]
    %v172 = vld [vmem:[%s167 + $0x20] sm:$0xff]
    %v173 = vld [vmem:[%s167 + $0x28] sm:$0xff]
    %v174 = vld [vmem:[%s167 + $0x30] sm:$0xff]
    %v175 = vld [vmem:[%s167 + $0x38] sm:$0xff]
    %v176 = vld [vmem:[%s167 + $0x40] sm:$0xff]
    %v177 = vld [vmem:[%s167 + $0x48] sm:$0xff]
    %v178 = vld [vmem:[%s167 + $0x50] sm:$0xff]
    %v179 = vld [vmem:[%s167 + $0x58] sm:$0xff]
    %v180 = vld [vmem:[%s167 + $0x60] sm:$0xff]
    %v181 = vld [vmem:[%s167 + $0x68] sm:$0xff]
    %v182 = vld [vmem:[%s167 + $0x70] sm:$0xff]
    %v183 = vld [vmem:[%s167 + $0x78] sm:$0xff]
    %v184 = vlaneseq
    %v185 = vshrl.u32 %v184, 7
    %v186 = vsub.s32 2, %v185
    %v187 = vrot.slane %v51, %v186
    %188 = vmatprep.subr.mxu0 0.0
    %189 = vmatpush1.msra.mxu0 %v183
    %190 = vmatprep.subr.mxu0 0.0
    %191 = vmatpush1.msra.mxu0 %v182
    %192 = vmatprep.subr.mxu0 0.0
    %193 = vmatpush1.msra.mxu0 %v181
    %194 = vmatprep.subr.mxu0 0.0
    %195 = vmatpush1.msra.mxu0 %v180
    %196 = vmatprep.subr.mxu0 0.0
    %197 = vmatpush1.msra.mxu0 %v179
    %198 = vmatprep.subr.mxu0 0.0
    %199 = vmatpush1.msra.mxu0 %v178
    %200 = vmatprep.subr.mxu0 0.0
    %201 = vmatpush1.msra.mxu0 %v177
    %202 = vmatprep.subr.mxu0 0.0
    %203 = vmatpush1.msra.mxu0 %v176
    %204 = vmatprep.subr.mxu0 0.0
    %205 = vmatpush1.msra.mxu0 %v175
    %206 = vmatprep.subr.mxu0 0.0
    %207 = vmatpush1.msra.mxu0 %v174
    %208 = vmatprep.subr.mxu0 0.0
    %209 = vmatpush1.msra.mxu0 %v173
    %210 = vmatprep.subr.mxu0 0.0
    %211 = vmatpush1.msra.mxu0 %v172
    %212 = vmatprep.subr.mxu0 0.0
    %213 = vmatpush1.msra.mxu0 %v171
    %214 = vmatprep.subr.mxu0 0.0
    %215 = vmatpush1.msra.mxu0 %v170
    %216 = vmatprep.subr.mxu0 0.0
    %217 = vmatpush1.msra.mxu0 %v169
    %218 = vmatprep.subr.mxu0 0.0
    %219 = vmatpush1.msra.mxu0 %v168
    %220 = vmatprep.subr.mxu0 0.0
    %221 = vmatpush2.msra.mxu0 0.0
    %222 = vmatprep.subr.mxu0 0.0
    %223 = vmatpush2.msra.mxu0 0.0
    %224 = vmatprep.subr.mxu0 0.0
    %225 = vmatpush2.msra.mxu0 0.0
    %226 = vmatprep.subr.mxu0 0.0
    %227 = vmatpush2.msra.mxu0 0.0
    %228 = vmatprep.subr.mxu0 0.0
    %229 = vmatpush2.msra.mxu0 0.0
    %230 = vmatprep.subr.mxu0 0.0
    %231 = vmatpush2.msra.mxu0 0.0
    %232 = vmatprep.subr.mxu0 0.0
    %233 = vmatpush2.msra.mxu0 0.0
    %234 = vmatprep.subr.mxu0 0.0
    %235 = vmatpush2.msra.mxu0 0.0
    %236 = vmatprep.subr.mxu0 0.0
    %237 = vmatpush2.msra.mxu0 0.0
    %238 = vmatprep.subr.mxu0 0.0
    %239 = vmatpush2.msra.mxu0 0.0
    %240 = vmatprep.subr.mxu0 0.0
    %241 = vmatpush2.msra.mxu0 0.0
    %242 = vmatprep.subr.mxu0 0.0
    %243 = vmatpush2.msra.mxu0 0.0
    %244 = vmatprep.subr.mxu0 0.0
    %245 = vmatpush2.msra.mxu0 0.0
    %246 = vmatprep.subr.mxu0 0.0
    %247 = vmatpush2.msra.mxu0 0.0
    %248 = vmatprep.subr.mxu0 0.0
    %249 = vmatpush2.msra.mxu0 0.0
    %250 = vmatprep.subr.mxu0 0.0
    %251 = vmatpush2.msra.mxu0 0.0
    %252 = vmatprep.mubr.f32.mxu0 0.0
    %253 = vmatmul.mubr.f32.gmra.mxu0 %v164
    %v254 = vpop.f32.mrf.mxu0
    %v255 = vadd.f32 %v187, %v254
    %v256 = vpop.f32.mrf.mxu0
    %257 = vdwg.mxu0
    %s258 = scalar_lea.vmem [#allocation2], 256
    %v259 = vld [vmem:[%s258] sm:$0xff]
    %v260 = vld [vmem:[%s258 + $0x8] sm:$0xff]
    %v261 = vld [vmem:[%s258 + $0x10] sm:$0xff]
    %v262 = vld [vmem:[%s258 + $0x18] sm:$0xff]
    %v263 = vld [vmem:[%s258 + $0x20] sm:$0xff]
    %v264 = vld [vmem:[%s258 + $0x28] sm:$0xff]
    %v265 = vld [vmem:[%s258 + $0x30] sm:$0xff]
    %v266 = vld [vmem:[%s258 + $0x38] sm:$0xff]
    %v267 = vld [vmem:[%s258 + $0x40] sm:$0xff]
    %v268 = vld [vmem:[%s258 + $0x48] sm:$0xff]
    %v269 = vld [vmem:[%s258 + $0x50] sm:$0xff]
    %v270 = vld [vmem:[%s258 + $0x58] sm:$0xff]
    %v271 = vld [vmem:[%s258 + $0x60] sm:$0xff]
    %v272 = vld [vmem:[%s258 + $0x68] sm:$0xff]
    %v273 = vld [vmem:[%s258 + $0x70] sm:$0xff]
    %v274 = vld [vmem:[%s258 + $0x78] sm:$0xff]
    %v275 = vlaneseq
    %v276 = vshrl.u32 %v275, 7
    %v277 = vsub.s32 3, %v276
    %v278 = vrot.slane %v51, %v277
    %279 = vmatprep.subr.mxu0 0.0
    %280 = vmatpush1.msra.mxu0 %v274
    %281 = vmatprep.subr.mxu0 0.0
    %282 = vmatpush1.msra.mxu0 %v273
    %283 = vmatprep.subr.mxu0 0.0
    %284 = vmatpush1.msra.mxu0 %v272
    %285 = vmatprep.subr.mxu0 0.0
    %286 = vmatpush1.msra.mxu0 %v271
    %287 = vmatprep.subr.mxu0 0.0
    %288 = vmatpush1.msra.mxu0 %v270
    %289 = vmatprep.subr.mxu0 0.0
    %290 = vmatpush1.msra.mxu0 %v269
    %291 = vmatprep.subr.mxu0 0.0
    %292 = vmatpush1.msra.mxu0 %v268
    %293 = vmatprep.subr.mxu0 0.0
    %294 = vmatpush1.msra.mxu0 %v267
    %295 = vmatprep.subr.mxu0 0.0
    %296 = vmatpush1.msra.mxu0 %v266
    %297 = vmatprep.subr.mxu0 0.0
    %298 = vmatpush1.msra.mxu0 %v265
    %299 = vmatprep.subr.mxu0 0.0
    %300 = vmatpush1.msra.mxu0 %v264
    %301 = vmatprep.subr.mxu0 0.0
    %302 = vmatpush1.msra.mxu0 %v263
    %303 = vmatprep.subr.mxu0 0.0
    %304 = vmatpush1.msra.mxu0 %v262
    %305 = vmatprep.subr.mxu0 0.0
    %306 = vmatpush1.msra.mxu0 %v261
    %307 = vmatprep.subr.mxu0 0.0
    %308 = vmatpush1.msra.mxu0 %v260
    %309 = vmatprep.subr.mxu0 0.0
    %310 = vmatpush1.msra.mxu0 %v259
    %311 = vmatprep.subr.mxu0 0.0
    %312 = vmatpush2.msra.mxu0 0.0
    %313 = vmatprep.subr.mxu0 0.0
    %314 = vmatpush2.msra.mxu0 0.0
    %315 = vmatprep.subr.mxu0 0.0
    %316 = vmatpush2.msra.mxu0 0.0
    %317 = vmatprep.subr.mxu0 0.0
    %318 = vmatpush2.msra.mxu0 0.0
    %319 = vmatprep.subr.mxu0 0.0
    %320 = vmatpush2.msra.mxu0 0.0
    %321 = vmatprep.subr.mxu0 0.0
    %322 = vmatpush2.msra.mxu0 0.0
    %323 = vmatprep.subr.mxu0 0.0
    %324 = vmatpush2.msra.mxu0 0.0
    %325 = vmatprep.subr.mxu0 0.0
    %326 = vmatpush2.msra.mxu0 0.0
    %327 = vmatprep.subr.mxu0 0.0
    %328 = vmatpush2.msra.mxu0 0.0
    %329 = vmatprep.subr.mxu0 0.0
    %330 = vmatpush2.msra.mxu0 0.0
    %331 = vmatprep.subr.mxu0 0.0
    %332 = vmatpush2.msra.mxu0 0.0
    %333 = vmatprep.subr.mxu0 0.0
    %334 = vmatpush2.msra.mxu0 0.0
    %335 = vmatprep.subr.mxu0 0.0
    %336 = vmatpush2.msra.mxu0 0.0
    %337 = vmatprep.subr.mxu0 0.0
    %338 = vmatpush2.msra.mxu0 0.0
    %339 = vmatprep.subr.mxu0 0.0
    %340 = vmatpush2.msra.mxu0 0.0
    %341 = vmatprep.subr.mxu0 0.0
    %342 = vmatpush2.msra.mxu0 0.0
    %343 = vmatprep.mubr.f32.mxu0 0.0
    %344 = vmatmul.mubr.f32.gmra.mxu0 %v255
    %v345 = vpop.f32.mrf.mxu0
    %v346 = vadd.f32 %v278, %v345
    %v347 = vpop.f32.mrf.mxu0
    %348 = vdwg.mxu0
    %v349 = vld [vmem:[#allocation5] sm:$0xff]
    %v350 = vld [vmem:[#allocation5 + $0x8] sm:$0xff]
    %v351 = vld [vmem:[#allocation5 + $0x10] sm:$0xff]
    %v352 = vld [vmem:[#allocation5 + $0x18] sm:$0xff]
    %v353 = vld [vmem:[#allocation5 + $0x20] sm:$0xff]
    %v354 = vld [vmem:[#allocation5 + $0x28] sm:$0xff]
    %v355 = vld [vmem:[#allocation5 + $0x30] sm:$0xff]
    %v356 = vld [vmem:[#allocation5 + $0x38] sm:$0xff]
    %v357 = vld [vmem:[#allocation5 + $0x40] sm:$0xff]
    %v358 = vld [vmem:[#allocation5 + $0x48] sm:$0xff]
    %v359 = vld [vmem:[#allocation5 + $0x50] sm:$0xff]
    %v360 = vld [vmem:[#allocation5 + $0x58] sm:$0xff]
    %v361 = vld [vmem:[#allocation5 + $0x60] sm:$0xff]
    %v362 = vld [vmem:[#allocation5 + $0x68] sm:$0xff]
    %v363 = vld [vmem:[#allocation5 + $0x70] sm:$0xff]
    %v364 = vld [vmem:[#allocation5 + $0x78] sm:$0xff]
    %v365 = vlaneseq
    %v366 = vshrl.u32 %v365, 7
    %v367 = vsub.s32 4, %v366
    %v368 = vrot.slane %v51, %v367
    %369 = vmatprep.subr.mxu0 0.0
    %370 = vmatpush1.msra.mxu0 %v364
    %371 = vmatprep.subr.mxu0 0.0
    %372 = vmatpush1.msra.mxu0 %v363
    %373 = vmatprep.subr.mxu0 0.0
    %374 = vmatpush1.msra.mxu0 %v362
    %375 = vmatprep.subr.mxu0 0.0
    %376 = vmatpush1.msra.mxu0 %v361
    %377 = vmatprep.subr.mxu0 0.0
    %378 = vmatpush1.msra.mxu0 %v360
    %379 = vmatprep.subr.mxu0 0.0
    %380 = vmatpush1.msra.mxu0 %v359
    %381 = vmatprep.subr.mxu0 0.0
    %382 = vmatpush1.msra.mxu0 %v358
    %383 = vmatprep.subr.mxu0 0.0
    %384 = vmatpush1.msra.mxu0 %v357
    %385 = vmatprep.subr.mxu0 0.0
    %386 = vmatpush1.msra.mxu0 %v356
    %387 = vmatprep.subr.mxu0 0.0
    %388 = vmatpush1.msra.mxu0 %v355
    %389 = vmatprep.subr.mxu0 0.0
    %390 = vmatpush1.msra.mxu0 %v354
    %391 = vmatprep.subr.mxu0 0.0
    %392 = vmatpush1.msra.mxu0 %v353
    %393 = vmatprep.subr.mxu0 0.0
    %394 = vmatpush1.msra.mxu0 %v352
    %395 = vmatprep.subr.mxu0 0.0
    %396 = vmatpush1.msra.mxu0 %v351
    %397 = vmatprep.subr.mxu0 0.0
    %398 = vmatpush1.msra.mxu0 %v350
    %399 = vmatprep.subr.mxu0 0.0
    %400 = vmatpush1.msra.mxu0 %v349
    %401 = vmatprep.subr.mxu0 0.0
    %402 = vmatpush2.msra.mxu0 0.0
    %403 = vmatprep.subr.mxu0 0.0
    %404 = vmatpush2.msra.mxu0 0.0
    %405 = vmatprep.subr.mxu0 0.0
    %406 = vmatpush2.msra.mxu0 0.0
    %407 = vmatprep.subr.mxu0 0.0
    %408 = vmatpush2.msra.mxu0 0.0
    %409 = vmatprep.subr.mxu0 0.0
    %410 = vmatpush2.msra.mxu0 0.0
    %411 = vmatprep.subr.mxu0 0.0
    %412 = vmatpush2.msra.mxu0 0.0
    %413 = vmatprep.subr.mxu0 0.0
    %414 = vmatpush2.msra.mxu0 0.0
    %415 = vmatprep.subr.mxu0 0.0
    %416 = vmatpush2.msra.mxu0 0.0
    %417 = vmatprep.subr.mxu0 0.0
    %418 = vmatpush2.msra.mxu0 0.0
    %419 = vmatprep.subr.mxu0 0.0
    %420 = vmatpush2.msra.mxu0 0.0
    %421 = vmatprep.subr.mxu0 0.0
    %422 = vmatpush2.msra.mxu0 0.0
    %423 = vmatprep.subr.mxu0 0.0
    %424 = vmatpush2.msra.mxu0 0.0
    %425 = vmatprep.subr.mxu0 0.0
    %426 = vmatpush2.msra.mxu0 0.0
    %427 = vmatprep.subr.mxu0 0.0
    %428 = vmatpush2.msra.mxu0 0.0
    %429 = vmatprep.subr.mxu0 0.0
    %430 = vmatpush2.msra.mxu0 0.0
    %431 = vmatprep.subr.mxu0 0.0
    %432 = vmatpush2.msra.mxu0 0.0
    %433 = vmatprep.mubr.f32.mxu0 0.0
    %434 = vmatmul.mubr.f32.gmra.mxu0 %v346
    %v435 = vpop.f32.mrf.mxu0
    %v436 = vadd.f32 %v368, %v435
    %v437 = vpop.f32.mrf.mxu0
    %438 = vdwg.mxu0
    %vm439 = vcmask 64512
    %440 = vst.msk [vmem:[#allocation7] sm:$0xff] %vm439, %v436
    // Predicated region
    $region30: #{tpu_custom_call.1} parent=1 // pred_check
      _
    $region31: #{tpu_custom_call.1} parent=1 // pred_check_branch
      %442 = sbr.rel (0) target = $region33
    $region32: #{tpu_custom_call.1} parent=1 // pred_region
      %s444 = ssub.s32 128, 128
      %445 = vsyncadd [#allocation4], %s444
      %s447 = sshll.u32 [#allocation7], 4
      %s448 = int_to_ptr.vmem [resolvable:$true] %s447
      %450 = dma.vmem_to_hbm [thread:$0]  %s448, 128, %s5, [#allocation4]
    $region33: #{tpu_custom_call.1} parent=1 // pred_fallthru
      _
    // Predicated region
    $region34: #{tpu_custom_call.1} parent=1 // pred_check
      _
    $region35: #{tpu_custom_call.1} parent=1 // pred_check_branch
      %452 = sbr.rel (0) target = $region37
    $region36: #{tpu_custom_call.1} parent=1 // pred_region
      %453 = dma.done [#allocation4], 128
    $region37: #{tpu_custom_call.1} parent=1 // pred_fallthru
      _
    %454 = vsyncpa [#allocation3], 1
    %455 = vsyncpa [#allocation6], 1
    %456 = vsyncpa [#allocation4], 1

</llo_original>
